<compile_context>
chip_gen: v5e
topology: v5e:2x2
jax: 0.10.0
libtpu: 0.0.40
codegen_flags: <defaults>
</compile_context>

<pallas_src>
import jax
import jax.numpy as jnp
from jax.experimental import pallas as pl
from jax.experimental.pallas import tpu as pltpu


def _round_up(v, m):
    return ((v + m - 1) // m) * m


# --------------------------------------------------------------------------- #
# Kernel
# --------------------------------------------------------------------------- #
def rnn_fc_kernel(x_ref, w_ref, out_ref):
    """Full tanh-RNN recurrence + final Linear, one invocation, no grid.

    x_ref   : (T*Bp, IA)  bf16  time-major input, ones column folded in (bias)
    w_ref   : (IA+2L+16, L) bf16 packed slab:
                rows [0, IA)        W_ih^T  (row I holds b_ih + b_hh)
                rows [IA, IA+L)     W_hh^T
                rows [IA+L, IA+2L)  W_fc^T
                row  IA+2L          b_fc
    out_ref : (Bp, L) f32  padded output (rows >= B / cols >= O sliced off)
    """
    Bp, L = out_ref.shape
    IA = x_ref.shape[1]
    T = x_ref.shape[0] // Bp

    wih = w_ref[0:IA, :]                                   # (IA, L) bf16
    whh = w_ref[IA:IA + L, :]                              # (L, L)  bf16, lives in vregs
    wfc = w_ref[IA + L:IA + 2 * L, :]                      # (L, L)  bf16
    bfc = w_ref[IA + 2 * L:IA + 2 * L + 1, :].astype(jnp.float32)   # (1, L)

    # Hoisted input projection for all timesteps (RNN bias folded via the ones
    # column): one MXU matmul, off the serial critical path.
    xw = jnp.dot(x_ref[...], wih, preferred_element_type=jnp.float32)   # (T*Bp, L) f32

    # Statically unrolled recurrence; h carried in vregs. h0 = 0 (PyTorch
    # default), so step 0 needs no h @ W_hh matmul.
    h = jnp.tanh(xw[0:Bp, :])
    for t in range(1, T):
        pre = xw[t * Bp:(t + 1) * Bp, :] + jnp.dot(
            h.astype(jnp.bfloat16), whh, preferred_element_type=jnp.float32)
        h = jnp.tanh(pre)

    # TODO(synk): nn.Dropout is stochastic in train mode; identity here (eval-mode).
    out_ref[...] = jnp.dot(h.astype(jnp.bfloat16), wfc,
                           preferred_element_type=jnp.float32) + bfc


# --------------------------------------------------------------------------- #
# One-time parameter preparation (out of the per-call path)
# --------------------------------------------------------------------------- #
def prepare_params(params):
    """Pack all weights/biases into a single bf16 slab, tile-aligned.

    Returns (slab, meta). Run ONCE; pass `slab` to the jitted forward.
    """
    H, I = params["w_ih"].shape[0], params["w_ih"].shape[1]
    O = params["w_fc"].shape[0]

    L = _round_up(max(H, O, 128), 128)          # shared lane width (Hp == Op)
    IA = _round_up(I + 1, 16)                   # augmented input width (+1 ones col),
                                                # 16-aligned for bf16 sublane tiles
    f32 = jnp.float32

    # Block A: W_ih^T with the combined RNN bias folded in as row I.
    wih_aug = jnp.zeros((IA, L), f32)
    wih_aug = wih_aug.at[:I, :H].set(params["w_ih"].T.astype(f32))
    wih_aug = wih_aug.at[I, :H].set((params["b_ih"] + params["b_hh"]).astype(f32))

    # Block B: W_hh^T, zero-padded (padded hidden columns stay exactly zero).
    whh = jnp.zeros((L, L), f32).at[:H, :H].set(params["w_hh"].T.astype(f32))

    # Block C: W_fc^T, zero-padded.
    wfc = jnp.zeros((L, L), f32).at[:H, :O].set(params["w_fc"].T.astype(f32))

    # Block D: b_fc in row 0 of a 16-row (tile-aligned) block.
    bfc = jnp.zeros((16, L), f32).at[0, :O].set(params["b_fc"].astype(f32))

    slab = jnp.concatenate([wih_aug, whh, wfc, bfc], axis=0).astype(jnp.bfloat16)
    meta = {"I": I, "H": H, "O": O, "IA": IA, "L": L}
    return slab, meta


def make_forward(meta):
    """Build a jitted forward(x, slab) -> (B, O) for fixed layer sizes."""
    I, IA, L, O = meta["I"], meta["IA"], meta["L"], meta["O"]

    @jax.jit
    def forward(x, slab):
        B, T, _ = x.shape
        Bp = _round_up(max(B, 8), 8)

        # Per-call input prep only: time-major, ones column (bias fold),
        # zero-pad batch -> Bp and features -> IA, cast to bf16.
        x_tm = jnp.transpose(x.astype(jnp.float32), (1, 0, 2))            # (T, B, I)
        x_aug = jnp.concatenate(
            [x_tm, jnp.ones((T, B, 1), jnp.float32)], axis=-1)            # (T, B, I+1)
        x_aug = jnp.pad(x_aug, ((0, 0), (0, Bp - B), (0, IA - (I + 1))))  # (T, Bp, IA)
        x_flat = x_aug.reshape(T * Bp, IA).astype(jnp.bfloat16)

        vmem = pl.BlockSpec(memory_space=pltpu.MemorySpace.VMEM)
        out_p = pl.pallas_call(
            rnn_fc_kernel,
            out_shape=jax.ShapeDtypeStruct((Bp, L), jnp.float32),
            in_specs=[vmem, vmem],
            out_specs=vmem,
        )(x_flat, slab)
        return out_p[:B, :O]

    return forward


# --------------------------------------------------------------------------- #
# Init / reference
# --------------------------------------------------------------------------- #
def init_params(key, input_size=2, hidden_size=64, output_size=2):
    """Deterministic init matching nn.RNN / nn.Linear shapes (U(-1/sqrt(H), 1/sqrt(H)))."""
    k = jax.random.split(key, 6)
    bound = 1.0 / jnp.sqrt(hidden_size)
    u = lambda kk, shape: jax.random.uniform(kk, shape, jnp.float32, -bound, bound)
    return {
        "w_ih": u(k[0], (hidden_size, input_size)),    # weight_ih_l0
        "w_hh": u(k[1], (hidden_size, hidden_size)),   # weight_hh_l0
        "b_ih": u(k[2], (hidden_size,)),               # bias_ih_l0
        "b_hh": u(k[3], (hidden_size,)),               # bias_hh_l0
        "w_fc": u(k[4], (output_size, hidden_size)),   # fc.weight
        "b_fc": u(k[5], (output_size,)),               # fc.bias
    }


def reference_forward(x, p):
    """Plain-JAX f32 reference (mirrors PyTorch eval-mode forward)."""
    B, T, I = x.shape
    H = p["w_hh"].shape[0]
    h = jnp.zeros((B, H), jnp.float32)
    for t in range(T):
        h = jnp.tanh(x[:, t, :] @ p["w_ih"].T + p["b_ih"]
                     + h @ p["w_hh"].T + p["b_hh"])
    return h @ p["w_fc"].T + p["b_fc"]


# --------------------------------------------------------------------------- #
if __name__ == "__main__":
    key = jax.random.PRNGKey(0)
    kx, kp = jax.random.split(key)

    B, T, I, H, O = 2, 8, 2, 64, 2
    x = jax.random.normal(kx, (B, T, I), jnp.float32)
    params = init_params(kp, input_size=I, hidden_size=H, output_size=O)

    # One-time weight prep (outside the per-call path), then jitted forward.
    slab, meta = prepare_params(params)
    slab = jax.block_until_ready(slab)
    forward = make_forward(meta)

    y = jax.block_until_ready(forward(x, slab))
    y_ref = reference_forward(x, params)

    assert y.shape == (B, O)
    # bf16 MXU operands with f32 accumulation -> loosened tolerance vs f32 reference.
    assert jnp.allclose(y, y_ref, atol=3e-2, rtol=3e-2), (y, y_ref)

    print("KERNEL_OK")
</pallas_src>

<mosaic_0001>
module attributes {stable_mosaic.version = 11 : i64} {
  func.func @rnn_fc_kernel(%arg0: memref<64x16xbf16, #tpu.memory_space<vmem>>, %arg1: memref<288x128xbf16, #tpu.memory_space<vmem>>, %arg2: memref<8x128xf32, #tpu.memory_space<vmem>>) attributes {dimension_semantics = [], scalar_prefetch = 0 : i64, scratch_operands = 0 : i64, tpu.core_type = #tpu.core_type<tc>} {
    %c0 = arith.constant 0 : index
    %c0_0 = arith.constant 0 : index
    %0 = vector.load %arg1[%c0, %c0_0] : memref<288x128xbf16, #tpu.memory_space<vmem>>, vector<16x128xbf16>
    %c16 = arith.constant 16 : index
    %c0_1 = arith.constant 0 : index
    %1 = vector.load %arg1[%c16, %c0_1] : memref<288x128xbf16, #tpu.memory_space<vmem>>, vector<128x128xbf16>
    %c144 = arith.constant 144 : index
    %c0_2 = arith.constant 0 : index
    %2 = vector.load %arg1[%c144, %c0_2] : memref<288x128xbf16, #tpu.memory_space<vmem>>, vector<128x128xbf16>
    %c272 = arith.constant 272 : index
    %c0_3 = arith.constant 0 : index
    %3 = vector.load %arg1[%c272, %c0_3] : memref<288x128xbf16, #tpu.memory_space<vmem>>, vector<1x128xbf16>
    %4 = arith.extf %3 : vector<1x128xbf16> to vector<1x128xf32>
    %c0_4 = arith.constant 0 : index
    %c0_5 = arith.constant 0 : index
    %5 = vector.load %arg0[%c0_4, %c0_5] : memref<64x16xbf16, #tpu.memory_space<vmem>>, vector<64x16xbf16>
    %cst = arith.constant dense<0.000000e+00> : vector<64x128xf32>
    %6 = tpu.matmul %5, %0, %cst {dimension_numbers = #tpu.dot_dimension_numbers<[1], [0], [0], [1], [0, 0, 1, 1], [], []>} : vector<64x16xbf16>, vector<16x128xbf16>, vector<64x128xf32> -> vector<64x128xf32>
    %7 = vector.extract_strided_slice %6 {offsets = [0, 0], sizes = [8, 128], strides = [1, 1]} : vector<64x128xf32> to vector<8x128xf32>
    %8 = math.tanh %7 : vector<8x128xf32>
    %9 = vector.extract_strided_slice %6 {offsets = [8, 0], sizes = [8, 128], strides = [1, 1]} : vector<64x128xf32> to vector<8x128xf32>
    %10 = arith.truncf %8 : vector<8x128xf32> to vector<8x128xbf16>
    %cst_6 = arith.constant dense<0.000000e+00> : vector<8x128xf32>
    %11 = tpu.matmul %10, %1, %cst_6 {dimension_numbers = #tpu.dot_dimension_numbers<[1], [0], [0], [1], [0, 0, 1, 1], [], []>} : vector<8x128xbf16>, vector<128x128xbf16>, vector<8x128xf32> -> vector<8x128xf32>
    %12 = arith.addf %9, %11 : vector<8x128xf32>
    %13 = math.tanh %12 : vector<8x128xf32>
    %14 = vector.extract_strided_slice %6 {offsets = [16, 0], sizes = [8, 128], strides = [1, 1]} : vector<64x128xf32> to vector<8x128xf32>
    %15 = arith.truncf %13 : vector<8x128xf32> to vector<8x128xbf16>
    %cst_7 = arith.constant dense<0.000000e+00> : vector<8x128xf32>
    %16 = tpu.matmul %15, %1, %cst_7 {dimension_numbers = #tpu.dot_dimension_numbers<[1], [0], [0], [1], [0, 0, 1, 1], [], []>} : vector<8x128xbf16>, vector<128x128xbf16>, vector<8x128xf32> -> vector<8x128xf32>
    %17 = arith.addf %14, %16 : vector<8x128xf32>
    %18 = math.tanh %17 : vector<8x128xf32>
    %19 = vector.extract_strided_slice %6 {offsets = [24, 0], sizes = [8, 128], strides = [1, 1]} : vector<64x128xf32> to vector<8x128xf32>
    %20 = arith.truncf %18 : vector<8x128xf32> to vector<8x128xbf16>
    %cst_8 = arith.constant dense<0.000000e+00> : vector<8x128xf32>
    %21 = tpu.matmul %20, %1, %cst_8 {dimension_numbers = #tpu.dot_dimension_numbers<[1], [0], [0], [1], [0, 0, 1, 1], [], []>} : vector<8x128xbf16>, vector<128x128xbf16>, vector<8x128xf32> -> vector<8x128xf32>
    %22 = arith.addf %19, %21 : vector<8x128xf32>
    %23 = math.tanh %22 : vector<8x128xf32>
    %24 = vector.extract_strided_slice %6 {offsets = [32, 0], sizes = [8, 128], strides = [1, 1]} : vector<64x128xf32> to vector<8x128xf32>
    %25 = arith.truncf %23 : vector<8x128xf32> to vector<8x128xbf16>
    %cst_9 = arith.constant dense<0.000000e+00> : vector<8x128xf32>
    %26 = tpu.matmul %25, %1, %cst_9 {dimension_numbers = #tpu.dot_dimension_numbers<[1], [0], [0], [1], [0, 0, 1, 1], [], []>} : vector<8x128xbf16>, vector<128x128xbf16>, vector<8x128xf32> -> vector<8x128xf32>
    %27 = arith.addf %24, %26 : vector<8x128xf32>
    %28 = math.tanh %27 : vector<8x128xf32>
    %29 = vector.extract_strided_slice %6 {offsets = [40, 0], sizes = [8, 128], strides = [1, 1]} : vector<64x128xf32> to vector<8x128xf32>
    %30 = arith.truncf %28 : vector<8x128xf32> to vector<8x128xbf16>
    %cst_10 = arith.constant dense<0.000000e+00> : vector<8x128xf32>
    %31 = tpu.matmul %30, %1, %cst_10 {dimension_numbers = #tpu.dot_dimension_numbers<[1], [0], [0], [1], [0, 0, 1, 1], [], []>} : vector<8x128xbf16>, vector<128x128xbf16>, vector<8x128xf32> -> vector<8x128xf32>
    %32 = arith.addf %29, %31 : vector<8x128xf32>
    %33 = math.tanh %32 : vector<8x128xf32>
    %34 = vector.extract_strided_slice %6 {offsets = [48, 0], sizes = [8, 128], strides = [1, 1]} : vector<64x128xf32> to vector<8x128xf32>
    %35 = arith.truncf %33 : vector<8x128xf32> to vector<8x128xbf16>
    %cst_11 = arith.constant dense<0.000000e+00> : vector<8x128xf32>
    %36 = tpu.matmul %35, %1, %cst_11 {dimension_numbers = #tpu.dot_dimension_numbers<[1], [0], [0], [1], [0, 0, 1, 1], [], []>} : vector<8x128xbf16>, vector<128x128xbf16>, vector<8x128xf32> -> vector<8x128xf32>
    %37 = arith.addf %34, %36 : vector<8x128xf32>
    %38 = math.tanh %37 : vector<8x128xf32>
    %39 = vector.extract_strided_slice %6 {offsets = [56, 0], sizes = [8, 128], strides = [1, 1]} : vector<64x128xf32> to vector<8x128xf32>
    %40 = arith.truncf %38 : vector<8x128xf32> to vector<8x128xbf16>
    %cst_12 = arith.constant dense<0.000000e+00> : vector<8x128xf32>
    %41 = tpu.matmul %40, %1, %cst_12 {dimension_numbers = #tpu.dot_dimension_numbers<[1], [0], [0], [1], [0, 0, 1, 1], [], []>} : vector<8x128xbf16>, vector<128x128xbf16>, vector<8x128xf32> -> vector<8x128xf32>
    %42 = arith.addf %39, %41 : vector<8x128xf32>
    %43 = math.tanh %42 : vector<8x128xf32>
    %44 = arith.truncf %43 : vector<8x128xf32> to vector<8x128xbf16>
    %cst_13 = arith.constant dense<0.000000e+00> : vector<8x128xf32>
    %45 = tpu.matmul %44, %2, %cst_13 {dimension_numbers = #tpu.dot_dimension_numbers<[1], [0], [0], [1], [0, 0, 1, 1], [], []>} : vector<8x128xbf16>, vector<128x128xbf16>, vector<8x128xf32> -> vector<8x128xf32>
    %46 = vector.broadcast %4 : vector<1x128xf32> to vector<8x128xf32>
    %47 = arith.addf %45, %46 : vector<8x128xf32>
    %c0_14 = arith.constant 0 : index
    %c0_15 = arith.constant 0 : index
    %48 = vector.load %arg2[%c0_14, %c0_15] : memref<8x128xf32, #tpu.memory_space<vmem>>, vector<8x128xf32>
    tpu.vector_store %arg2[%c0_14, %c0_15], %47 {strides = array<i32>} : memref<8x128xf32, #tpu.memory_space<vmem>>, vector<8x128xf32>,
    return
  }
}

</mosaic_0001>

<llo_original>
// kernel: forward.1
$region0: #{forward.1}
  #allocation0 [shape = 'u32[]', space=smem, size = 0x4, offset = 0x4, fixed_abs, tag = 'smem constant byte address 0x4 - core index']
  #allocation1 [shape = 'u32[72,128]{1,0:T(1,128)}', space=vmem, size = 0x9000, scoped, tag = 'internal scratch']
  %s0 = inlined_call_operand.vmem [shape: bf16[64,16], index: 0, kind: input, shape index: {}]
  %s1 = inlined_call_operand.hbm [shape: bf16[288,128], index: 1, kind: input, shape index: {}]
  %s2 = inlined_call_operand.vmem [shape: f32[8,128], index: 2, kind: output, shape index: {}]
  %s3 = sld [smem:[#allocation0]]
  $region22: #{forward.1} parent=0
    _
  %s5 = ssub.s32 1, %s3
  %s6 = scalar_select 0, %s5, %s3
  $region1: #{forward.1} parent=0
    #allocation2 [shape = 'u8[73728]{0}', space=vmem, size = 0x12000, scoped, tag = 'input window, operand 1, single buffered']
    #allocation3 [shape = 's32[1]{0}', space=sflag, size = 0x4, scoped, tag = 'scoped memory for forward.1']
    %7 = vsyncpa [#allocation3], 0
    // Predicated region
    $region2: #{forward.1} parent=1 // pred_check
      _
    $region3: #{forward.1} parent=1 // pred_check_branch
      %9 = sbr.rel (0) target = $region5
    $region4: #{forward.1} parent=1 // pred_region
      _
    $region5: #{forward.1} parent=1 // pred_fallthru
      _
    // Predicated region
    $region6: #{forward.1} parent=1 // pred_check
      _
    $region7: #{forward.1} parent=1 // pred_check_branch
      %11 = sbr.rel (0) target = $region9
    $region8: #{forward.1} parent=1 // pred_region
      %13 = vsyncadd [#allocation3], 0
      %s14 = sshll.u32 %s1, 4
      %s15 = int_to_ptr.hbm [resolvable:$true] %s14
      %s16 = sshll.u32 [#allocation2], 4
      %s17 = int_to_ptr.vmem [resolvable:$true] %s16
      %22 = dma.hbm_to_vmem [thread:$0]  %s15, 2304, %s17, [#allocation3], 64, 64, 4
    $region9: #{forward.1} parent=1 // pred_fallthru
      _
    // Predicated region
    $region10: #{forward.1} parent=1 // pred_check
      _
    $region11: #{forward.1} parent=1 // pred_check_branch
      %24 = sbr.rel (0) target = $region13
    $region12: #{forward.1} parent=1 // pred_region
      %26 = dma.done [#allocation3], 2304
    $region13: #{forward.1} parent=1 // pred_fallthru
      _
    %v28 = vld [vmem:[#allocation2] sm:$0xf]
    %v29 = vld [vmem:[#allocation2 + $0x4] sm:$0xf]
    %v30 = vld [vmem:[#allocation2 + $0x8] sm:$0xf]
    %v31 = vld [vmem:[#allocation2 + $0xc] sm:$0xf]
    %v32 = vld [vmem:[#allocation2 + $0x10] sm:$0xf]
    %v33 = vld [vmem:[#allocation2 + $0x14] sm:$0xf]
    %v34 = vld [vmem:[#allocation2 + $0x18] sm:$0xf]
    %v35 = vld [vmem:[#allocation2 + $0x1c] sm:$0xf]
    %v36 = vld [vmem:[#allocation2 + $0x20] sm:$0xf]
    %v37 = vld [vmem:[#allocation2 + $0x24] sm:$0xf]
    %v38 = vld [vmem:[#allocation2 + $0x28] sm:$0xf]
    %v39 = vld [vmem:[#allocation2 + $0x2c] sm:$0xf]
    %v40 = vld [vmem:[#allocation2 + $0x30] sm:$0xf]
    %v41 = vld [vmem:[#allocation2 + $0x34] sm:$0xf]
    %v42 = vld [vmem:[#allocation2 + $0x38] sm:$0xf]
    %v43 = vld [vmem:[#allocation2 + $0x3c] sm:$0xf]
    %v44 = vld [vmem:[#allocation2 + $0x40] sm:$0xf]
    %v45 = vld [vmem:[#allocation2 + $0x44] sm:$0xf]
    %v46 = vld [vmem:[#allocation2 + $0x48] sm:$0xf]
    %v47 = vld [vmem:[#allocation2 + $0x4c] sm:$0xf]
    %v48 = vld [vmem:[#allocation2 + $0x50] sm:$0xf]
    %v49 = vld [vmem:[#allocation2 + $0x54] sm:$0xf]
    %v50 = vld [vmem:[#allocation2 + $0x58] sm:$0xf]
    %v51 = vld [vmem:[#allocation2 + $0x5c] sm:$0xf]
    %v52 = vld [vmem:[#allocation2 + $0x60] sm:$0xf]
    %v53 = vld [vmem:[#allocation2 + $0x64] sm:$0xf]
    %v54 = vld [vmem:[#allocation2 + $0x68] sm:$0xf]
    %v55 = vld [vmem:[#allocation2 + $0x6c] sm:$0xf]
    %v56 = vld [vmem:[#allocation2 + $0x70] sm:$0xf]
    %v57 = vld [vmem:[#allocation2 + $0x74] sm:$0xf]
    %v58 = vld [vmem:[#allocation2 + $0x78] sm:$0xf]
    %v59 = vld [vmem:[#allocation2 + $0x7c] sm:$0xf]
    %v60 = vld [vmem:[#allocation2 + $0x80] sm:$0xf]
    %v61 = vld [vmem:[#allocation2 + $0x84] sm:$0xf]
    %v62 = vld [vmem:[#allocation2 + $0x88] sm:$0x1]
    %v63 = vunpack.c.l.bf16 %v62
    %v64 = vld [vmem:[%s0] sm:$0xf]
    %v65 = vld [vmem:[%s0 + $0x4] sm:$0xf]
    %v66 = vld [vmem:[%s0 + $0x8] sm:$0xf]
    %v67 = vld [vmem:[%s0 + $0xc] sm:$0xf]
    %v68 = vld [vmem:[%s0 + $0x10] sm:$0xf]
    %v69 = vld [vmem:[%s0 + $0x14] sm:$0xf]
    %v70 = vld [vmem:[%s0 + $0x18] sm:$0xf]
    %v71 = vld [vmem:[%s0 + $0x1c] sm:$0xf]
    %v80 = vunpack.c.l.b16 %v64
    %v81 = vunpack.c.l.b16 %v65
    %v82 = vunpack.c.l.b16 %v66
    %v83 = vunpack.c.l.b16 %v67
    %v84 = vunpack.c.l.b16 %v68
    %v85 = vunpack.c.l.b16 %v69
    %v86 = vunpack.c.l.b16 %v70
    %v87 = vunpack.c.l.b16 %v71
    %v88 = vpack.c.b16 %v81, %v80
    %v89 = vpack.c.b16 %v83, %v82
    %v90 = vpack.c.b16 %v85, %v84
    %v91 = vpack.c.b16 %v87, %v86
    %v94 = vunpack.c.l.b16 %v28
    %v95 = vunpack.c.l.b16 %v29
    %v96 = vpack.c.b16 %v95, %v94
    %vm98 = vcmask 130048
    %v100 = vsel %vm98, %v88, 0
    %v103 = vsel %vm98, %v89, 0
    %v106 = vsel %vm98, %v90, 0
    %v109 = vsel %vm98, %v91, 0
    %111 = vmatpush.bf16.msra.mxu0 0
    %112 = vmatpush.bf16.msra.mxu0 0
    %113 = vmatpush.bf16.msra.mxu0 0
    %114 = vmatpush.bf16.msra.mxu0 0
    %115 = vmatpush.bf16.msra.mxu0 0
    %116 = vmatpush.bf16.msra.mxu0 0
    %117 = vmatpush.bf16.msra.mxu0 0
    %118 = vmatpush.bf16.msra.mxu0 %v96
    %119 = vmatmul.bf16.gmra.mxu0 %v100
    %v120 = vpop.f32.mrf.mxu0
    %v121 = vadd.f32 0.0, %v120
    %v122 = vpop.f32.mrf.mxu0
    %v123 = vadd.f32 0.0, %v122
    %124 = vmatmul.bf16.gmra.mxu0 %v103
    %v125 = vpop.f32.mrf.mxu0
    %v126 = vadd.f32 0.0, %v125
    %v127 = vpop.f32.mrf.mxu0
    %v128 = vadd.f32 0.0, %v127
    %129 = vmatmul.bf16.gmra.mxu0 %v106
    %v130 = vpop.f32.mrf.mxu0
    %v131 = vadd.f32 0.0, %v130
    %v132 = vpop.f32.mrf.mxu0
    %v133 = vadd.f32 0.0, %v132
    %134 = vmatmul.bf16.gmra.mxu0 %v109
    %v135 = vpop.f32.mrf.mxu0
    %v136 = vadd.f32 0.0, %v135
    %v137 = vpop.f32.mrf.mxu0
    %v138 = vadd.f32 0.0, %v137
    %139 = vdwg.mxu0
    %v140 = vtanh.pop %v121
    %v141 = vpack.c.bf16 %v140, %v140
    %v158 = vunpack.c.l.b16 %v30
    %v159 = vunpack.c.l.b16 %v31
    %v160 = vunpack.c.l.b16 %v32
    %v161 = vunpack.c.l.b16 %v33
    %v162 = vunpack.c.l.b16 %v34
    %v163 = vunpack.c.l.b16 %v35
    %v164 = vunpack.c.l.b16 %v36
    %v165 = vunpack.c.l.b16 %v37
    %v166 = vunpack.c.l.b16 %v38
    %v167 = vunpack.c.l.b16 %v39
    %v168 = vunpack.c.l.b16 %v40
    %v169 = vunpack.c.l.b16 %v41
    %v170 = vunpack.c.l.b16 %v42
    %v171 = vunpack.c.l.b16 %v43
    %v172 = vunpack.c.l.b16 %v44
    %v173 = vunpack.c.l.b16 %v45
    %v174 = vpack.c.b16 %v159, %v158
    %v175 = vpack.c.b16 %v161, %v160
    %v176 = vpack.c.b16 %v163, %v162
    %v177 = vpack.c.b16 %v165, %v164
    %v178 = vpack.c.b16 %v167, %v166
    %v179 = vpack.c.b16 %v169, %v168
    %v180 = vpack.c.b16 %v171, %v170
    %v181 = vpack.c.b16 %v173, %v172
    %190 = vmatpush.bf16.msra.mxu0 %v181
    %191 = vmatpush.bf16.msra.mxu0 %v180
    %192 = vmatpush.bf16.msra.mxu0 %v179
    %193 = vmatpush.bf16.msra.mxu0 %v178
    %194 = vmatpush.bf16.msra.mxu0 %v177
    %195 = vmatpush.bf16.msra.mxu0 %v176
    %196 = vmatpush.bf16.msra.mxu0 %v175
    %197 = vmatpush.bf16.msra.mxu0 %v174
    %198 = vmatmul.bf16.gmra.mxu0 %v141
    %v199 = vpop.f32.mrf.mxu0
    %v200 = vadd.f32 0.0, %v199
    %v201 = vpop.f32.mrf.mxu0
    %202 = vdwg.mxu0
    %v203 = vadd.f32 %v123, %v200
    %v204 = vtanh.pop %v203
    %v205 = vpack.c.bf16 %v204, %v204
    %206 = vmatpush.bf16.msra.mxu0 %v181
    %207 = vmatpush.bf16.msra.mxu0 %v180
    %208 = vmatpush.bf16.msra.mxu0 %v179
    %209 = vmatpush.bf16.msra.mxu0 %v178
    %210 = vmatpush.bf16.msra.mxu0 %v177
    %211 = vmatpush.bf16.msra.mxu0 %v176
    %212 = vmatpush.bf16.msra.mxu0 %v175
    %213 = vmatpush.bf16.msra.mxu0 %v174
    %214 = vmatmul.bf16.gmra.mxu0 %v205
    %v215 = vpop.f32.mrf.mxu0
    %v216 = vadd.f32 0.0, %v215
    %v217 = vpop.f32.mrf.mxu0
    %218 = vdwg.mxu0
    %v219 = vadd.f32 %v126, %v216
    %v220 = vtanh.pop %v219
    %v221 = vpack.c.bf16 %v220, %v220
    %222 = vmatpush.bf16.msra.mxu0 %v181
    %223 = vmatpush.bf16.msra.mxu0 %v180
    %224 = vmatpush.bf16.msra.mxu0 %v179
    %225 = vmatpush.bf16.msra.mxu0 %v178
    %226 = vmatpush.bf16.msra.mxu0 %v177
    %227 = vmatpush.bf16.msra.mxu0 %v176
    %228 = vmatpush.bf16.msra.mxu0 %v175
    %229 = vmatpush.bf16.msra.mxu0 %v174
    %230 = vmatmul.bf16.gmra.mxu0 %v221
    %v231 = vpop.f32.mrf.mxu0
    %v232 = vadd.f32 0.0, %v231
    %v233 = vpop.f32.mrf.mxu0
    %234 = vdwg.mxu0
    %v235 = vadd.f32 %v128, %v232
    %v236 = vtanh.pop %v235
    %v237 = vpack.c.bf16 %v236, %v236
    %238 = vmatpush.bf16.msra.mxu0 %v181
    %239 = vmatpush.bf16.msra.mxu0 %v180
    %240 = vmatpush.bf16.msra.mxu0 %v179
    %241 = vmatpush.bf16.msra.mxu0 %v178
    %242 = vmatpush.bf16.msra.mxu0 %v177
    %243 = vmatpush.bf16.msra.mxu0 %v176
    %244 = vmatpush.bf16.msra.mxu0 %v175
    %245 = vmatpush.bf16.msra.mxu0 %v174
    %246 = vmatmul.bf16.gmra.mxu0 %v237
    %v247 = vpop.f32.mrf.mxu0
    %v248 = vadd.f32 0.0, %v247
    %v249 = vpop.f32.mrf.mxu0
    %250 = vdwg.mxu0
    %v251 = vadd.f32 %v131, %v248
    %v252 = vtanh.pop %v251
    %v253 = vpack.c.bf16 %v252, %v252
    %254 = vmatpush.bf16.msra.mxu0 %v181
    %255 = vmatpush.bf16.msra.mxu0 %v180
    %256 = vmatpush.bf16.msra.mxu0 %v179
    %257 = vmatpush.bf16.msra.mxu0 %v178
    %258 = vmatpush.bf16.msra.mxu0 %v177
    %259 = vmatpush.bf16.msra.mxu0 %v176
    %260 = vmatpush.bf16.msra.mxu0 %v175
    %261 = vmatpush.bf16.msra.mxu0 %v174
    %262 = vmatmul.bf16.gmra.mxu0 %v253
    %v263 = vpop.f32.mrf.mxu0
    %v264 = vadd.f32 0.0, %v263
    %v265 = vpop.f32.mrf.mxu0
    %266 = vdwg.mxu0
    %v267 = vadd.f32 %v133, %v264
    %v268 = vtanh.pop %v267
    %v269 = vpack.c.bf16 %v268, %v268
    %270 = vmatpush.bf16.msra.mxu0 %v181
    %271 = vmatpush.bf16.msra.mxu0 %v180
    %272 = vmatpush.bf16.msra.mxu0 %v179
    %273 = vmatpush.bf16.msra.mxu0 %v178
    %274 = vmatpush.bf16.msra.mxu0 %v177
    %275 = vmatpush.bf16.msra.mxu0 %v176
    %276 = vmatpush.bf16.msra.mxu0 %v175
    %277 = vmatpush.bf16.msra.mxu0 %v174
    %278 = vmatmul.bf16.gmra.mxu0 %v269
    %v279 = vpop.f32.mrf.mxu0
    %v280 = vadd.f32 0.0, %v279
    %v281 = vpop.f32.mrf.mxu0
    %282 = vdwg.mxu0
    %v283 = vadd.f32 %v136, %v280
    %v284 = vtanh.pop %v283
    %v285 = vpack.c.bf16 %v284, %v284
    %286 = vmatpush.bf16.msra.mxu0 %v181
    %287 = vmatpush.bf16.msra.mxu0 %v180
    %288 = vmatpush.bf16.msra.mxu0 %v179
    %289 = vmatpush.bf16.msra.mxu0 %v178
    %290 = vmatpush.bf16.msra.mxu0 %v177
    %291 = vmatpush.bf16.msra.mxu0 %v176
    %292 = vmatpush.bf16.msra.mxu0 %v175
    %293 = vmatpush.bf16.msra.mxu0 %v174
    %294 = vmatmul.bf16.gmra.mxu0 %v285
    %v295 = vpop.f32.mrf.mxu0
    %v296 = vadd.f32 0.0, %v295
    %v297 = vpop.f32.mrf.mxu0
    %298 = vdwg.mxu0
    %v299 = vadd.f32 %v138, %v296
    %v300 = vtanh.pop %v299
    %v301 = vpack.c.bf16 %v300, %v300
    %v302 = vperm.slane %v63, 0
    %v319 = vunpack.c.l.b16 %v46
    %v320 = vunpack.c.l.b16 %v47
    %v321 = vunpack.c.l.b16 %v48
    %v322 = vunpack.c.l.b16 %v49
    %v323 = vunpack.c.l.b16 %v50
    %v324 = vunpack.c.l.b16 %v51
    %v325 = vunpack.c.l.b16 %v52
    %v326 = vunpack.c.l.b16 %v53
    %v327 = vunpack.c.l.b16 %v54
    %v328 = vunpack.c.l.b16 %v55
    %v329 = vunpack.c.l.b16 %v56
    %v330 = vunpack.c.l.b16 %v57
    %v331 = vunpack.c.l.b16 %v58
    %v332 = vunpack.c.l.b16 %v59
    %v333 = vunpack.c.l.b16 %v60
    %v334 = vunpack.c.l.b16 %v61
    %v335 = vpack.c.b16 %v320, %v319
    %v336 = vpack.c.b16 %v322, %v321
    %v337 = vpack.c.b16 %v324, %v323
    %v338 = vpack.c.b16 %v326, %v325
    %v339 = vpack.c.b16 %v328, %v327
    %v340 = vpack.c.b16 %v330, %v329
    %v341 = vpack.c.b16 %v332, %v331
    %v342 = vpack.c.b16 %v334, %v333
    %351 = vmatpush.bf16.msra.mxu0 %v342
    %352 = vmatpush.bf16.msra.mxu0 %v341
    %353 = vmatpush.bf16.msra.mxu0 %v340
    %354 = vmatpush.bf16.msra.mxu0 %v339
    %355 = vmatpush.bf16.msra.mxu0 %v338
    %356 = vmatpush.bf16.msra.mxu0 %v337
    %357 = vmatpush.bf16.msra.mxu0 %v336
    %358 = vmatpush.bf16.msra.mxu0 %v335
    %359 = vmatmul.bf16.gmra.mxu0 %v301
    %v360 = vpop.f32.mrf.mxu0
    %v361 = vadd.f32 %v302, %v360
    %v362 = vpop.f32.mrf.mxu0
    %363 = vdwg.mxu0
    %364 = vst [vmem:[%s2] sm:$0xff] %v361
    // Predicated region
    $region14: #{forward.1} parent=1 // pred_check
      _
    $region15: #{forward.1} parent=1 // pred_check_branch
      %366 = sbr.rel (0) target = $region17
    $region16: #{forward.1} parent=1 // pred_region
      _
    $region17: #{forward.1} parent=1 // pred_fallthru
      _
    // Predicated region
    $region18: #{forward.1} parent=1 // pred_check
      _
    $region19: #{forward.1} parent=1 // pred_check_branch
      %368 = sbr.rel (0) target = $region21
    $region20: #{forward.1} parent=1 // pred_region
      _
    $region21: #{forward.1} parent=1 // pred_fallthru
      _
    %369 = vsyncpa [#allocation3], 1

</llo_original>
